<compile_context>
chip_gen: v7x
topology: tpu7x:2x2x1
jax: 0.10.0
libtpu: 0.0.40
codegen_flags: <defaults>
</compile_context>

<pallas_src>
import functools

import jax
import jax.numpy as jnp
from jax.experimental import pallas as pl
from jax.experimental.pallas import tpu as pltpu

BN_EPS = 1e-5
LANES = 128
OUT_DIM = 5          # real fc4 width
OUT_PAD = 8          # fc4 width padded to a sublane multiple
PER_ROW_VMEM_BYTES = 3 * 1024   # conservative real residency (lane-padded acts)


def mlp_kernel(x_ref, w_ref, p_ref, o_ref):
    n = x_ref.shape[0]
    inv_n = jnp.float32(1.0 / n)

    # One dense load per packed buffer, then zero-cost value slices.
    w = w_ref[...]              # (144, 128) bf16 weight slab
    p = p_ref[...]              # (8, 128)  f32 gamma/beta/b4 row block

    w1 = w[0:16, 0:64]          # (16, 64)
    w2 = w[16:80, 0:32]         # (64, 32)
    w3 = w[80:112, 0:32]        # (32, 32)
    w4 = w[112:144, 0:OUT_PAD]  # (32, 8)   cols 5..7 are zero padding

    g1, be1 = p[0:1, 0:64], p[1:2, 0:64]
    g2, be2 = p[2:3, 0:32], p[3:4, 0:32]
    g3, be3 = p[4:5, 0:32], p[5:6, 0:32]
    b4 = p[6:7, 0:OUT_PAD]      # (1, 8)    cols 5..7 are zero padding

    def mm(a, b_bf16):
        # bf16 operands, f32 MXU accumulation.
        return jnp.dot(a.astype(jnp.bfloat16), b_bf16,
                       preferred_element_type=jnp.float32)

    def bn_relu(h, gamma, beta):
        # Single-pass batch statistics (biased variance, matching BatchNorm1d
        # training-mode forward) + fused affine + ReLU, all in f32.
        mean = jnp.sum(h, axis=0, keepdims=True) * inv_n
        ex2 = jnp.sum(h * h, axis=0, keepdims=True) * inv_n
        var = jnp.maximum(ex2 - mean * mean, 0.0)        # clamp f32 cancellation
        scale = gamma * jax.lax.rsqrt(var + BN_EPS)      # (1, F)
        shift = beta - mean * scale                      # (1, F)
        return jnp.maximum(h * scale + shift, 0.0)

    # Linear biases b1/b2/b3 are omitted: they cancel exactly in the BN mean
    # subtraction that immediately follows each fc layer.
    h = bn_relu(mm(x_ref[...], w1), g1, be1)
    h = bn_relu(mm(h, w2), g2, be2)
    h = bn_relu(mm(h, w3), g3, be3)

    logits = mm(h, w4) + b4                              # (N, 8) f32

    # nn.Softmax(0): softmax over dim 0 (the batch axis).  Padded columns
    # 5..7 hold zeros -> harmless 1/N junk, sliced away in the wrapper.
    m = jnp.max(logits, axis=0, keepdims=True)
    o_ref[...] = jnp.exp(logits - m)                     # exp written in place
    denom = jnp.sum(o_ref[...], axis=0, keepdims=True)
    r = pl.reciprocal(denom, approx=True)
    r = r * (2.0 - denom * r)                            # one Newton step
    o_ref[...] = o_ref[...] * r                          # rescale in place


def _pad_cols(a, width=LANES):
    return jnp.pad(a, ((0, 0), (0, width - a.shape[1])))


def _pack_params(params):
    """Pack parameters into one bf16 weight slab and one f32 (8,128) row block."""
    wslab = jnp.concatenate(
        [
            _pad_cols(params["w1"]),   # rows   0: 16, cols 0:64
            _pad_cols(params["w2"]),   # rows  16: 80, cols 0:32
            _pad_cols(params["w3"]),   # rows  80:112, cols 0:32
            _pad_cols(params["w4"]),   # rows 112:144, cols 0:5 (rest zero)
        ],
        axis=0,
    ).astype(jnp.bfloat16)             # (144, 128) bf16
    prow = jnp.concatenate(
        [
            _pad_cols(params["g1"]), _pad_cols(params["be1"]),
            _pad_cols(params["g2"]), _pad_cols(params["be2"]),
            _pad_cols(params["g3"]), _pad_cols(params["be3"]),
            _pad_cols(params["b4"]),
            jnp.zeros((1, LANES), jnp.float32),
        ],
        axis=0,
    )                                  # (8, 128) f32
    return wslab, prow


@functools.lru_cache(maxsize=None)
def _vmem_limit_bytes():
    """Generation-aware scoped-VMEM limit: 3/4 of physical capacity."""
    try:
        phys = int(pltpu.get_tpu_info().vmem_capacity_bytes)
    except Exception:
        phys = 64 * 1024 * 1024        # conservative fallback (v7x physical)
    return max(32 * 1024 * 1024, (phys * 3) // 4)


@jax.jit
def three_layer_model_batnorm_masked(x, params):
    """x: (N, 16) float32 -> (N, 5) float32 (softmax over the batch axis)."""
    n = x.shape[0]
    limit = _vmem_limit_bytes()
    if n * PER_ROW_VMEM_BYTES + (2 << 20) > limit:
        # TODO(synk): batch-tiled two-pass BN/softmax path for large N.
        raise NotImplementedError(
            f"batch={n} exceeds the single-block VMEM ceiling "
            f"(~{(limit - (2 << 20)) // PER_ROW_VMEM_BYTES} rows on this chip)")
    wslab, prow = _pack_params(params)
    vmem = pl.BlockSpec(memory_space=pltpu.MemorySpace.VMEM)
    out_padded = pl.pallas_call(
        mlp_kernel,
        out_shape=jax.ShapeDtypeStruct((n, OUT_PAD), jnp.float32),
        in_specs=[vmem, vmem, vmem],
        out_specs=vmem,
        compiler_params=pltpu.CompilerParams(vmem_limit_bytes=limit),
    )(x, wslab, prow)
    return out_padded[:, :OUT_DIM]


def init_params(key):
    """Deterministic init mimicking nn.Linear default (U[-1/sqrt(fan_in), +]).

    BN gamma/beta are randomized here (PyTorch defaults are 1/0) so the
    self-check genuinely exercises the packed-parameter slices.  b1/b2/b3 are
    generated (the module has them, and the reference uses them) but the
    kernel does not need them: they cancel in the BN mean subtraction."""
    dims = [(16, 64), (64, 32), (32, 32), (32, 5)]
    widths = [64, 32, 32]
    keys = jax.random.split(key, 2 * len(dims) + 2 * len(widths))
    params = {}
    for i, (fan_in, fan_out) in enumerate(dims):
        bound = 1.0 / (fan_in ** 0.5)
        params[f"w{i + 1}"] = jax.random.uniform(
            keys[2 * i], (fan_in, fan_out), jnp.float32, -bound, bound)
        params[f"b{i + 1}"] = jax.random.uniform(
            keys[2 * i + 1], (1, fan_out), jnp.float32, -bound, bound)
    off = 2 * len(dims)
    for i, w in enumerate(widths):
        params[f"g{i + 1}"] = jax.random.uniform(
            keys[off + 2 * i], (1, w), jnp.float32, 0.5, 1.5)
        params[f"be{i + 1}"] = jax.random.uniform(
            keys[off + 2 * i + 1], (1, w), jnp.float32, -0.5, 0.5)
    return params


def reference_forward(x, params, matmul_dtype=jnp.float32):
    """Pure-JAX reference of the PyTorch forward (biases included, two-pass
    variance, exact division).  matmul_dtype=bfloat16 mirrors the kernel's
    mixed-precision matmuls with f32 accumulation."""
    def mm(a, b):
        return jnp.dot(a.astype(matmul_dtype), b.astype(matmul_dtype),
                       preferred_element_type=jnp.float32)

    h = x
    for i in range(1, 4):
        h = mm(h, params[f"w{i}"]) + params[f"b{i}"]
        mean = jnp.mean(h, axis=0, keepdims=True)
        var = jnp.mean((h - mean) ** 2, axis=0, keepdims=True)
        h = (h - mean) / jnp.sqrt(var + BN_EPS)
        h = jnp.maximum(h * params[f"g{i}"] + params[f"be{i}"], 0.0)
    logits = mm(h, params["w4"]) + params["b4"]
    return jax.nn.softmax(logits, axis=0)


if __name__ == "__main__":
    key = jax.random.PRNGKey(0)
    pkey, xkey = jax.random.split(key)
    params = init_params(pkey)

    batch = 8
    x = jax.random.normal(xkey, (batch, 16), jnp.float32)

    out = three_layer_model_batnorm_masked(x, params)
    out = jax.block_until_ready(out)
    assert out.shape == (batch, 5)

    # Tight check against a reference that uses the same bf16-matmul numerics.
    ref_mixed = reference_forward(x, params, matmul_dtype=jnp.bfloat16)
    assert float(jnp.max(jnp.abs(out - ref_mixed))) < 5e-3, "kernel/mixed-ref mismatch"

    # Loose check against the full-f32 reference (bf16 matmul rounding only).
    ref_f32 = reference_forward(x, params, matmul_dtype=jnp.float32)
    assert float(jnp.max(jnp.abs(out - ref_f32))) < 2e-2, "kernel/f32-ref mismatch"

    # Softmax over the batch axis: every output column sums to 1.
    assert float(jnp.max(jnp.abs(out.sum(axis=0) - 1.0))) < 1e-3, "softmax not normalized"

    print("KERNEL_OK")
</pallas_src>

<mosaic_0001>
module attributes {stable_mosaic.version = 11 : i64} {
  func.func @mlp_kernel(%arg0: memref<8x16xf32, #tpu.memory_space<vmem>>, %arg1: memref<144x128xbf16, #tpu.memory_space<vmem>>, %arg2: memref<8x128xf32, #tpu.memory_space<vmem>>, %arg3: memref<8x8xf32, #tpu.memory_space<vmem>>) attributes {dimension_semantics = [], scalar_prefetch = 0 : i64, scratch_operands = 0 : i64, tpu.core_type = #tpu.core_type<tc>} {
    %c0 = arith.constant 0 : index
    %c0_0 = arith.constant 0 : index
    %0 = vector.load %arg1[%c0, %c0_0] : memref<144x128xbf16, #tpu.memory_space<vmem>>, vector<144x128xbf16>
    %c0_1 = arith.constant 0 : index
    %c0_2 = arith.constant 0 : index
    %1 = vector.load %arg2[%c0_1, %c0_2] : memref<8x128xf32, #tpu.memory_space<vmem>>, vector<8x128xf32>
    %2 = vector.extract_strided_slice %0 {offsets = [0, 0], sizes = [16, 64], strides = [1, 1]} : vector<144x128xbf16> to vector<16x64xbf16>
    %3 = vector.extract_strided_slice %0 {offsets = [16, 0], sizes = [64, 32], strides = [1, 1]} : vector<144x128xbf16> to vector<64x32xbf16>
    %4 = vector.extract_strided_slice %0 {offsets = [80, 0], sizes = [32, 32], strides = [1, 1]} : vector<144x128xbf16> to vector<32x32xbf16>
    %5 = vector.extract_strided_slice %0 {offsets = [112, 0], sizes = [32, 8], strides = [1, 1]} : vector<144x128xbf16> to vector<32x8xbf16>
    %6 = vector.extract_strided_slice %1 {offsets = [0, 0], sizes = [1, 64], strides = [1, 1]} : vector<8x128xf32> to vector<1x64xf32>
    %7 = vector.extract_strided_slice %1 {offsets = [1, 0], sizes = [1, 64], strides = [1, 1]} : vector<8x128xf32> to vector<1x64xf32>
    %8 = vector.extract_strided_slice %1 {offsets = [2, 0], sizes = [1, 32], strides = [1, 1]} : vector<8x128xf32> to vector<1x32xf32>
    %9 = vector.extract_strided_slice %1 {offsets = [3, 0], sizes = [1, 32], strides = [1, 1]} : vector<8x128xf32> to vector<1x32xf32>
    %10 = vector.extract_strided_slice %1 {offsets = [4, 0], sizes = [1, 32], strides = [1, 1]} : vector<8x128xf32> to vector<1x32xf32>
    %11 = vector.extract_strided_slice %1 {offsets = [5, 0], sizes = [1, 32], strides = [1, 1]} : vector<8x128xf32> to vector<1x32xf32>
    %12 = vector.extract_strided_slice %1 {offsets = [6, 0], sizes = [1, 8], strides = [1, 1]} : vector<8x128xf32> to vector<1x8xf32>
    %c0_3 = arith.constant 0 : index
    %c0_4 = arith.constant 0 : index
    %13 = vector.load %arg0[%c0_3, %c0_4] : memref<8x16xf32, #tpu.memory_space<vmem>>, vector<8x16xf32>
    %14 = arith.truncf %13 : vector<8x16xf32> to vector<8x16xbf16>
    %cst = arith.constant dense<0.000000e+00> : vector<8x64xf32>
    %15 = tpu.matmul %14, %2, %cst {dimension_numbers = #tpu.dot_dimension_numbers<[1], [0], [0], [1], [0, 0, 1, 1], [], []>} : vector<8x16xbf16>, vector<16x64xbf16>, vector<8x64xf32> -> vector<8x64xf32>
    %cst_5 = arith.constant dense<0.000000e+00> : vector<64xf32>
    %16 = vector.multi_reduction <add>, %15, %cst_5 [0] : vector<8x64xf32> to vector<64xf32>
    %17 = vector.shape_cast %16 : vector<64xf32> to vector<1x64xf32>
    %cst_6 = arith.constant 1.250000e-01 : f32
    %18 = vector.broadcast %cst_6 : f32 to vector<1x64xf32>
    %19 = arith.mulf %17, %18 : vector<1x64xf32>
    %20 = arith.mulf %15, %15 : vector<8x64xf32>
    %cst_7 = arith.constant dense<0.000000e+00> : vector<64xf32>
    %21 = vector.multi_reduction <add>, %20, %cst_7 [0] : vector<8x64xf32> to vector<64xf32>
    %22 = vector.shape_cast %21 : vector<64xf32> to vector<1x64xf32>
    %cst_8 = arith.constant 1.250000e-01 : f32
    %23 = vector.broadcast %cst_8 : f32 to vector<1x64xf32>
    %24 = arith.mulf %22, %23 : vector<1x64xf32>
    %25 = arith.mulf %19, %19 : vector<1x64xf32>
    %26 = arith.subf %24, %25 : vector<1x64xf32>
    %cst_9 = arith.constant 0.000000e+00 : f32
    %27 = vector.broadcast %cst_9 : f32 to vector<1x64xf32>
    %28 = arith.maximumf %26, %27 : vector<1x64xf32>
    %cst_10 = arith.constant 9.99999974E-6 : f32
    %29 = vector.broadcast %cst_10 : f32 to vector<1x64xf32>
    %30 = arith.addf %28, %29 : vector<1x64xf32>
    %31 = math.rsqrt %30 : vector<1x64xf32>
    %32 = arith.mulf %6, %31 : vector<1x64xf32>
    %33 = arith.mulf %19, %32 : vector<1x64xf32>
    %34 = arith.subf %7, %33 : vector<1x64xf32>
    %35 = vector.broadcast %32 : vector<1x64xf32> to vector<8x64xf32>
    %36 = arith.mulf %15, %35 : vector<8x64xf32>
    %37 = vector.broadcast %34 : vector<1x64xf32> to vector<8x64xf32>
    %38 = arith.addf %36, %37 : vector<8x64xf32>
    %cst_11 = arith.constant 0.000000e+00 : f32
    %39 = vector.broadcast %cst_11 : f32 to vector<8x64xf32>
    %40 = arith.maximumf %38, %39 : vector<8x64xf32>
    %41 = arith.truncf %40 : vector<8x64xf32> to vector<8x64xbf16>
    %cst_12 = arith.constant dense<0.000000e+00> : vector<8x32xf32>
    %42 = tpu.matmul %41, %3, %cst_12 {dimension_numbers = #tpu.dot_dimension_numbers<[1], [0], [0], [1], [0, 0, 1, 1], [], []>} : vector<8x64xbf16>, vector<64x32xbf16>, vector<8x32xf32> -> vector<8x32xf32>
    %cst_13 = arith.constant dense<0.000000e+00> : vector<32xf32>
    %43 = vector.multi_reduction <add>, %42, %cst_13 [0] : vector<8x32xf32> to vector<32xf32>
    %44 = vector.shape_cast %43 : vector<32xf32> to vector<1x32xf32>
    %cst_14 = arith.constant 1.250000e-01 : f32
    %45 = vector.broadcast %cst_14 : f32 to vector<1x32xf32>
    %46 = arith.mulf %44, %45 : vector<1x32xf32>
    %47 = arith.mulf %42, %42 : vector<8x32xf32>
    %cst_15 = arith.constant dense<0.000000e+00> : vector<32xf32>
    %48 = vector.multi_reduction <add>, %47, %cst_15 [0] : vector<8x32xf32> to vector<32xf32>
    %49 = vector.shape_cast %48 : vector<32xf32> to vector<1x32xf32>
    %cst_16 = arith.constant 1.250000e-01 : f32
    %50 = vector.broadcast %cst_16 : f32 to vector<1x32xf32>
    %51 = arith.mulf %49, %50 : vector<1x32xf32>
    %52 = arith.mulf %46, %46 : vector<1x32xf32>
    %53 = arith.subf %51, %52 : vector<1x32xf32>
    %cst_17 = arith.constant 0.000000e+00 : f32
    %54 = vector.broadcast %cst_17 : f32 to vector<1x32xf32>
    %55 = arith.maximumf %53, %54 : vector<1x32xf32>
    %cst_18 = arith.constant 9.99999974E-6 : f32
    %56 = vector.broadcast %cst_18 : f32 to vector<1x32xf32>
    %57 = arith.addf %55, %56 : vector<1x32xf32>
    %58 = math.rsqrt %57 : vector<1x32xf32>
    %59 = arith.mulf %8, %58 : vector<1x32xf32>
    %60 = arith.mulf %46, %59 : vector<1x32xf32>
    %61 = arith.subf %9, %60 : vector<1x32xf32>
    %62 = vector.broadcast %59 : vector<1x32xf32> to vector<8x32xf32>
    %63 = arith.mulf %42, %62 : vector<8x32xf32>
    %64 = vector.broadcast %61 : vector<1x32xf32> to vector<8x32xf32>
    %65 = arith.addf %63, %64 : vector<8x32xf32>
    %cst_19 = arith.constant 0.000000e+00 : f32
    %66 = vector.broadcast %cst_19 : f32 to vector<8x32xf32>
    %67 = arith.maximumf %65, %66 : vector<8x32xf32>
    %68 = arith.truncf %67 : vector<8x32xf32> to vector<8x32xbf16>
    %cst_20 = arith.constant dense<0.000000e+00> : vector<8x32xf32>
    %69 = tpu.matmul %68, %4, %cst_20 {dimension_numbers = #tpu.dot_dimension_numbers<[1], [0], [0], [1], [0, 0, 1, 1], [], []>} : vector<8x32xbf16>, vector<32x32xbf16>, vector<8x32xf32> -> vector<8x32xf32>
    %cst_21 = arith.constant dense<0.000000e+00> : vector<32xf32>
    %70 = vector.multi_reduction <add>, %69, %cst_21 [0] : vector<8x32xf32> to vector<32xf32>
    %71 = vector.shape_cast %70 : vector<32xf32> to vector<1x32xf32>
    %cst_22 = arith.constant 1.250000e-01 : f32
    %72 = vector.broadcast %cst_22 : f32 to vector<1x32xf32>
    %73 = arith.mulf %71, %72 : vector<1x32xf32>
    %74 = arith.mulf %69, %69 : vector<8x32xf32>
    %cst_23 = arith.constant dense<0.000000e+00> : vector<32xf32>
    %75 = vector.multi_reduction <add>, %74, %cst_23 [0] : vector<8x32xf32> to vector<32xf32>
    %76 = vector.shape_cast %75 : vector<32xf32> to vector<1x32xf32>
    %cst_24 = arith.constant 1.250000e-01 : f32
    %77 = vector.broadcast %cst_24 : f32 to vector<1x32xf32>
    %78 = arith.mulf %76, %77 : vector<1x32xf32>
    %79 = arith.mulf %73, %73 : vector<1x32xf32>
    %80 = arith.subf %78, %79 : vector<1x32xf32>
    %cst_25 = arith.constant 0.000000e+00 : f32
    %81 = vector.broadcast %cst_25 : f32 to vector<1x32xf32>
    %82 = arith.maximumf %80, %81 : vector<1x32xf32>
    %cst_26 = arith.constant 9.99999974E-6 : f32
    %83 = vector.broadcast %cst_26 : f32 to vector<1x32xf32>
    %84 = arith.addf %82, %83 : vector<1x32xf32>
    %85 = math.rsqrt %84 : vector<1x32xf32>
    %86 = arith.mulf %10, %85 : vector<1x32xf32>
    %87 = arith.mulf %73, %86 : vector<1x32xf32>
    %88 = arith.subf %11, %87 : vector<1x32xf32>
    %89 = vector.broadcast %86 : vector<1x32xf32> to vector<8x32xf32>
    %90 = arith.mulf %69, %89 : vector<8x32xf32>
    %91 = vector.broadcast %88 : vector<1x32xf32> to vector<8x32xf32>
    %92 = arith.addf %90, %91 : vector<8x32xf32>
    %cst_27 = arith.constant 0.000000e+00 : f32
    %93 = vector.broadcast %cst_27 : f32 to vector<8x32xf32>
    %94 = arith.maximumf %92, %93 : vector<8x32xf32>
    %95 = arith.truncf %94 : vector<8x32xf32> to vector<8x32xbf16>
    %cst_28 = arith.constant dense<0.000000e+00> : vector<8x8xf32>
    %96 = tpu.matmul %95, %5, %cst_28 {dimension_numbers = #tpu.dot_dimension_numbers<[1], [0], [0], [1], [0, 0, 1, 1], [], []>} : vector<8x32xbf16>, vector<32x8xbf16>, vector<8x8xf32> -> vector<8x8xf32>
    %97 = vector.broadcast %12 : vector<1x8xf32> to vector<8x8xf32>
    %98 = arith.addf %96, %97 : vector<8x8xf32>
    %cst_29 = arith.constant dense<0xFF800000> : vector<8xf32>
    %99 = vector.multi_reduction <maximumf>, %98, %cst_29 [0] : vector<8x8xf32> to vector<8xf32>
    %100 = vector.shape_cast %99 : vector<8xf32> to vector<1x8xf32>
    %101 = vector.broadcast %100 : vector<1x8xf32> to vector<8x8xf32>
    %102 = arith.subf %98, %101 : vector<8x8xf32>
    %103 = math.exp %102 : vector<8x8xf32>
    %c0_30 = arith.constant 0 : index
    %c0_31 = arith.constant 0 : index
    %104 = vector.load %arg3[%c0_30, %c0_31] : memref<8x8xf32, #tpu.memory_space<vmem>>, vector<8x8xf32>
    tpu.vector_store %arg3[%c0_30, %c0_31], %103 {strides = array<i32>} : memref<8x8xf32, #tpu.memory_space<vmem>>, vector<8x8xf32>,
    %c0_32 = arith.constant 0 : index
    %c0_33 = arith.constant 0 : index
    %105 = vector.load %arg3[%c0_32, %c0_33] : memref<8x8xf32, #tpu.memory_space<vmem>>, vector<8x8xf32>
    %cst_34 = arith.constant dense<0.000000e+00> : vector<8xf32>
    %106 = vector.multi_reduction <add>, %105, %cst_34 [0] : vector<8x8xf32> to vector<8xf32>
    %107 = vector.shape_cast %106 : vector<8xf32> to vector<1x8xf32>
    %108 = tpu.reciprocal %107 {approx = true} : vector<1x8xf32> -> vector<1x8xf32>
    %109 = arith.mulf %107, %108 : vector<1x8xf32>
    %cst_35 = arith.constant 2.000000e+00 : f32
    %110 = vector.broadcast %cst_35 : f32 to vector<1x8xf32>
    %111 = arith.subf %110, %109 : vector<1x8xf32>
    %112 = arith.mulf %108, %111 : vector<1x8xf32>
    %c0_36 = arith.constant 0 : index
    %c0_37 = arith.constant 0 : index
    %113 = vector.load %arg3[%c0_36, %c0_37] : memref<8x8xf32, #tpu.memory_space<vmem>>, vector<8x8xf32>
    %114 = vector.broadcast %112 : vector<1x8xf32> to vector<8x8xf32>
    %115 = arith.mulf %113, %114 : vector<8x8xf32>
    %c0_38 = arith.constant 0 : index
    %c0_39 = arith.constant 0 : index
    %116 = vector.load %arg3[%c0_38, %c0_39] : memref<8x8xf32, #tpu.memory_space<vmem>>, vector<8x8xf32>
    tpu.vector_store %arg3[%c0_38, %c0_39], %115 {strides = array<i32>} : memref<8x8xf32, #tpu.memory_space<vmem>>, vector<8x8xf32>,
    return
  }
}

</mosaic_0001>

<llo_original>
// kernel: three_layer_model_batnorm_masked.1
$region0: #{three_layer_model_batnorm_masked.1}
  #allocation0 [shape = 'u32[]', space=smem, size = 0x4, offset = 0x4, fixed_abs, tag = 'smem constant byte address 0x4 - core index']
  #allocation1 [shape = 'u32[144,128]{1,0:T(1,128)}', space=vmem, size = 0x12000, scoped, tag = 'internal scratch']
  %s0 = inlined_call_operand.vmem [shape: f32[8,16], index: 0, kind: input, shape index: {}]
  %s1 = inlined_call_operand.vmem [shape: bf16[144,128], index: 1, kind: input, shape index: {}]
  %s2 = inlined_call_operand.vmem [shape: f32[8,128], index: 2, kind: input, shape index: {}]
  %s3 = inlined_call_operand.hbm [shape: f32[8,8], index: 3, kind: output, shape index: {}]
  %s4 = sld [smem:[#allocation0]]
  $region22: #{three_layer_model_batnorm_masked.1} parent=0
    _
  %s6 = ssub.s32 1, %s4
  %s7 = scalar_select 0, %s6, %s4
  $region1: #{three_layer_model_batnorm_masked.1} parent=0
    #allocation2 [shape = 'u8[4096]{0}', space=vmem, size = 0x1000, scoped, tag = 'output window, operand 0, single buffered']
    #allocation3 [shape = 's32[1]{0}', space=sflag, size = 0x4, scoped, tag = 'scoped memory for three_layer_model_batnorm_masked.1']
    %8 = vsyncpa [#allocation3], 0
    // Predicated region
    $region2: #{three_layer_model_batnorm_masked.1} parent=1 // pred_check
      _
    $region3: #{three_layer_model_batnorm_masked.1} parent=1 // pred_check_branch
      %10 = sbr.rel (0) target = $region5
    $region4: #{three_layer_model_batnorm_masked.1} parent=1 // pred_region
      _
    $region5: #{three_layer_model_batnorm_masked.1} parent=1 // pred_fallthru
      _
    // Predicated region
    $region6: #{three_layer_model_batnorm_masked.1} parent=1 // pred_check
      _
    $region7: #{three_layer_model_batnorm_masked.1} parent=1 // pred_check_branch
      %12 = sbr.rel (0) target = $region9
    $region8: #{three_layer_model_batnorm_masked.1} parent=1 // pred_region
      _
    $region9: #{three_layer_model_batnorm_masked.1} parent=1 // pred_fallthru
      _
    // Predicated region
    $region10: #{three_layer_model_batnorm_masked.1} parent=1 // pred_check
      _
    $region11: #{three_layer_model_batnorm_masked.1} parent=1 // pred_check_branch
      %14 = sbr.rel (0) target = $region13
    $region12: #{three_layer_model_batnorm_masked.1} parent=1 // pred_region
      _
    $region13: #{three_layer_model_batnorm_masked.1} parent=1 // pred_fallthru
      _
    %v16 = vld [vmem:[%s1] sm:$0xf]
    %v17 = vld [vmem:[%s1 + $0x4] sm:$0xf]
    %v18 = vld [vmem:[%s1 + $0x8] sm:$0xf]
    %v19 = vld [vmem:[%s1 + $0xc] sm:$0xf]
    %v20 = vld [vmem:[%s1 + $0x10] sm:$0xf]
    %v21 = vld [vmem:[%s1 + $0x14] sm:$0xf]
    %v22 = vld [vmem:[%s1 + $0x18] sm:$0xf]
    %v23 = vld [vmem:[%s1 + $0x1c] sm:$0xf]
    %v24 = vld [vmem:[%s1 + $0x20] sm:$0xf]
    %v25 = vld [vmem:[%s1 + $0x24] sm:$0xf]
    %v26 = vld [vmem:[%s1 + $0x28] sm:$0xf]
    %v27 = vld [vmem:[%s1 + $0x2c] sm:$0xf]
    %v28 = vld [vmem:[%s1 + $0x30] sm:$0xf]
    %v29 = vld [vmem:[%s1 + $0x34] sm:$0xf]
    %v30 = vld [vmem:[%s1 + $0x38] sm:$0xf]
    %v31 = vld [vmem:[%s1 + $0x3c] sm:$0xf]
    %v32 = vld [vmem:[%s1 + $0x40] sm:$0xf]
    %v33 = vld [vmem:[%s1 + $0x44] sm:$0xf]
    %v34 = vld [vmem:[%s2] sm:$0xff]
    %v35 = vld [vmem:[%s0] sm:$0xff]
    %v36 = vpack.c.bf16 %v35, %v35
    %v39 = vunpack.c.l.b16 %v16
    %v40 = vunpack.c.l.b16 %v17
    %v41 = vpack.c.b16 %v40, %v39
    %vm43 = vcmask 130048
    %v45 = vsel %vm43, %v36, 0
    %47 = vmatprep.subr.bf16.mxu0 0
    %48 = vmatpush1.bf16.msra.mxu0 %v41
    %49 = vmatprep.subr.bf16.mxu0 0
    %50 = vmatpush1.bf16.msra.mxu0 0
    %51 = vmatprep.subr.bf16.mxu0 0
    %52 = vmatpush1.bf16.msra.mxu0 0
    %53 = vmatprep.subr.bf16.mxu0 0
    %54 = vmatpush1.bf16.msra.mxu0 0
    %55 = vmatprep.subr.bf16.mxu0 0
    %56 = vmatpush1.bf16.msra.mxu0 0
    %57 = vmatprep.subr.bf16.mxu0 0
    %58 = vmatpush1.bf16.msra.mxu0 0
    %59 = vmatprep.subr.bf16.mxu0 0
    %60 = vmatpush1.bf16.msra.mxu0 0
    %61 = vmatprep.subr.bf16.mxu0 0
    %62 = vmatpush1.bf16.msra.mxu0 0
    %63 = vmatprep.subr.bf16.mxu0 0
    %64 = vmatpush1.bf16.msra.mxu0 0
    %65 = vmatprep.subr.bf16.mxu0 0
    %66 = vmatpush1.bf16.msra.mxu0 0
    %67 = vmatprep.subr.bf16.mxu0 0
    %68 = vmatpush1.bf16.msra.mxu0 0
    %69 = vmatprep.subr.bf16.mxu0 0
    %70 = vmatpush1.bf16.msra.mxu0 0
    %71 = vmatprep.subr.bf16.mxu0 0
    %72 = vmatpush1.bf16.msra.mxu0 0
    %73 = vmatprep.subr.bf16.mxu0 0
    %74 = vmatpush1.bf16.msra.mxu0 0
    %75 = vmatprep.subr.bf16.mxu0 0
    %76 = vmatpush1.bf16.msra.mxu0 0
    %77 = vmatprep.subr.bf16.mxu0 0
    %78 = vmatpush1.bf16.msra.mxu0 0
    %79 = vmatprep.mubr.bf16.mxu0 0
    %80 = vmatmul.mubr.bf16.gmra.mrb[0].mxu0 %v45
    %v81 = vpop.f32.mrb[0].mxu0
    %v82 = vadd.f32 0.0, %v81
    %v83 = vpop.f32.mrb[0].mxu0
    %v84 = vpop.f32.mrb[0].mxu0
    %v85 = vpop.f32.mrb[0].mxu0
    %86 = vdwg.mxu0
    %vm87 = vcmask 523264
    %v88 = vsel %vm87, %v82, 0.0
    %v89 = vrot.slane %v88, 4
    %v90 = vadd.f32 %v88, %v89
    %v91 = vrot.slane %v90, 2
    %v92 = vadd.f32 %v90, %v91
    %v93 = vrot.slane %v92, 1
    %v94 = vadd.f32 %v92, %v93
    %v95 = vmul.f32 %v94, 0.125
    %v96 = vmul.f32 %v82, %v82
    %v97 = vsel %vm87, %v96, 0.0
    %v98 = vrot.slane %v97, 4
    %v99 = vadd.f32 %v97, %v98
    %v100 = vrot.slane %v99, 2
    %v101 = vadd.f32 %v99, %v100
    %v102 = vrot.slane %v101, 1
    %v103 = vadd.f32 %v101, %v102
    %v104 = vmul.f32 %v103, 0.125
    %v105 = vmul.f32 %v95, %v95
    %v106 = vsub.f32 %v104, %v105
    %v107 = vmax.f32 %v106, 0.0
    %v108 = vadd.f32 %v107, 1e-05
    %v109 = vrsqrt.pop %v108
    %v110 = vmul.f32 %v34, %v109
    %v111 = vmul.f32 %v95, %v110
    %v113 = vrot.slane %v111, 7
    %v115 = vsub.f32 %v34, %v113
    %v116 = vlaneseq
    %v117 = vshrl.u32 %v116, 7
    %v118 = vsub.s32 0, %v117
    %v119 = vrot.slane %v110, %v118
    %v120 = vmul.f32 %v82, %v119
    %v121 = vlaneseq
    %v122 = vshrl.u32 %v121, 7
    %v123 = vsub.s32 1, %v122
    %v124 = vrot.slane %v115, %v123
    %v125 = vadd.f32 %v120, %v124
    %v126 = vmax.f32 %v125, 0.0
    %v127 = vpack.c.bf16 %v126, %v126
    %v136 = vunpack.c.l.b16 %v18
    %v137 = vunpack.c.l.b16 %v19
    %v138 = vunpack.c.l.b16 %v20
    %v139 = vunpack.c.l.b16 %v21
    %v140 = vunpack.c.l.b16 %v22
    %v141 = vunpack.c.l.b16 %v23
    %v142 = vunpack.c.l.b16 %v24
    %v143 = vunpack.c.l.b16 %v25
    %v144 = vpack.c.b16 %v137, %v136
    %v145 = vpack.c.b16 %v139, %v138
    %v146 = vpack.c.b16 %v141, %v140
    %v147 = vpack.c.b16 %v143, %v142
    %v153 = vsel %vm87, %v127, 0
    %155 = vmatprep.subr.bf16.mxu0 0
    %156 = vmatpush1.bf16.msra.mxu0 %v144
    %157 = vmatprep.subr.bf16.mxu0 0
    %158 = vmatpush1.bf16.msra.mxu0 %v145
    %159 = vmatprep.subr.bf16.mxu0 0
    %160 = vmatpush1.bf16.msra.mxu0 %v146
    %161 = vmatprep.subr.bf16.mxu0 0
    %162 = vmatpush1.bf16.msra.mxu0 %v147
    %163 = vmatprep.subr.bf16.mxu0 0
    %164 = vmatpush1.bf16.msra.mxu0 0
    %165 = vmatprep.subr.bf16.mxu0 0
    %166 = vmatpush1.bf16.msra.mxu0 0
    %167 = vmatprep.subr.bf16.mxu0 0
    %168 = vmatpush1.bf16.msra.mxu0 0
    %169 = vmatprep.subr.bf16.mxu0 0
    %170 = vmatpush1.bf16.msra.mxu0 0
    %171 = vmatprep.subr.bf16.mxu0 0
    %172 = vmatpush1.bf16.msra.mxu0 0
    %173 = vmatprep.subr.bf16.mxu0 0
    %174 = vmatpush1.bf16.msra.mxu0 0
    %175 = vmatprep.subr.bf16.mxu0 0
    %176 = vmatpush1.bf16.msra.mxu0 0
    %177 = vmatprep.subr.bf16.mxu0 0
    %178 = vmatpush1.bf16.msra.mxu0 0
    %179 = vmatprep.subr.bf16.mxu0 0
    %180 = vmatpush1.bf16.msra.mxu0 0
    %181 = vmatprep.subr.bf16.mxu0 0
    %182 = vmatpush1.bf16.msra.mxu0 0
    %183 = vmatprep.subr.bf16.mxu0 0
    %184 = vmatpush1.bf16.msra.mxu0 0
    %185 = vmatprep.subr.bf16.mxu0 0
    %186 = vmatpush1.bf16.msra.mxu0 0
    %187 = vmatprep.mubr.bf16.mxu0 0
    %188 = vmatmul.mubr.bf16.gmra.mrb[0].mxu0 %v153
    %v189 = vpop.f32.mrb[0].mxu0
    %v190 = vadd.f32 0.0, %v189
    %v191 = vpop.f32.mrb[0].mxu0
    %v192 = vpop.f32.mrb[0].mxu0
    %v193 = vpop.f32.mrb[0].mxu0
    %194 = vdwg.mxu0
    %vm195 = vcmask 261120
    %v196 = vsel %vm195, %v190, 0.0
    %v197 = vrot.slane %v196, 4
    %v198 = vadd.f32 %v196, %v197
    %v199 = vrot.slane %v198, 2
    %v200 = vadd.f32 %v198, %v199
    %v201 = vrot.slane %v200, 1
    %v202 = vadd.f32 %v200, %v201
    %v203 = vmul.f32 %v202, 0.125
    %v204 = vmul.f32 %v190, %v190
    %v205 = vsel %vm195, %v204, 0.0
    %v206 = vrot.slane %v205, 4
    %v207 = vadd.f32 %v205, %v206
    %v208 = vrot.slane %v207, 2
    %v209 = vadd.f32 %v207, %v208
    %v210 = vrot.slane %v209, 1
    %v211 = vadd.f32 %v209, %v210
    %v212 = vmul.f32 %v211, 0.125
    %v213 = vmul.f32 %v203, %v203
    %v214 = vsub.f32 %v212, %v213
    %v215 = vmax.f32 %v214, 0.0
    %v216 = vadd.f32 %v215, 1e-05
    %v217 = vrsqrt.pop %v216
    %v218 = vmul.f32 %v34, %v217
    %v219 = vmul.f32 %v203, %v218
    %v221 = vrot.slane %v219, 7
    %v223 = vsub.f32 %v34, %v221
    %v224 = vlaneseq
    %v225 = vshrl.u32 %v224, 7
    %v226 = vsub.s32 2, %v225
    %v227 = vrot.slane %v218, %v226
    %v228 = vmul.f32 %v190, %v227
    %v229 = vlaneseq
    %v230 = vshrl.u32 %v229, 7
    %v231 = vsub.s32 3, %v230
    %v232 = vrot.slane %v223, %v231
    %v233 = vadd.f32 %v228, %v232
    %v234 = vmax.f32 %v233, 0.0
    %v235 = vpack.c.bf16 %v234, %v234
    %v240 = vunpack.c.l.b16 %v26
    %v241 = vunpack.c.l.b16 %v27
    %v242 = vunpack.c.l.b16 %v28
    %v243 = vunpack.c.l.b16 %v29
    %v244 = vpack.c.b16 %v241, %v240
    %v245 = vpack.c.b16 %v243, %v242
    %v249 = vsel %vm195, %v235, 0
    %251 = vmatprep.subr.bf16.mxu0 0
    %252 = vmatpush1.bf16.msra.mxu0 %v244
    %253 = vmatprep.subr.bf16.mxu0 0
    %254 = vmatpush1.bf16.msra.mxu0 %v245
    %255 = vmatprep.subr.bf16.mxu0 0
    %256 = vmatpush1.bf16.msra.mxu0 0
    %257 = vmatprep.subr.bf16.mxu0 0
    %258 = vmatpush1.bf16.msra.mxu0 0
    %259 = vmatprep.subr.bf16.mxu0 0
    %260 = vmatpush1.bf16.msra.mxu0 0
    %261 = vmatprep.subr.bf16.mxu0 0
    %262 = vmatpush1.bf16.msra.mxu0 0
    %263 = vmatprep.subr.bf16.mxu0 0
    %264 = vmatpush1.bf16.msra.mxu0 0
    %265 = vmatprep.subr.bf16.mxu0 0
    %266 = vmatpush1.bf16.msra.mxu0 0
    %267 = vmatprep.subr.bf16.mxu0 0
    %268 = vmatpush1.bf16.msra.mxu0 0
    %269 = vmatprep.subr.bf16.mxu0 0
    %270 = vmatpush1.bf16.msra.mxu0 0
    %271 = vmatprep.subr.bf16.mxu0 0
    %272 = vmatpush1.bf16.msra.mxu0 0
    %273 = vmatprep.subr.bf16.mxu0 0
    %274 = vmatpush1.bf16.msra.mxu0 0
    %275 = vmatprep.subr.bf16.mxu0 0
    %276 = vmatpush1.bf16.msra.mxu0 0
    %277 = vmatprep.subr.bf16.mxu0 0
    %278 = vmatpush1.bf16.msra.mxu0 0
    %279 = vmatprep.subr.bf16.mxu0 0
    %280 = vmatpush1.bf16.msra.mxu0 0
    %281 = vmatprep.subr.bf16.mxu0 0
    %282 = vmatpush1.bf16.msra.mxu0 0
    %283 = vmatprep.mubr.bf16.mxu0 0
    %284 = vmatmul.mubr.bf16.gmra.mrb[0].mxu0 %v249
    %v285 = vpop.f32.mrb[0].mxu0
    %v286 = vadd.f32 0.0, %v285
    %v287 = vpop.f32.mrb[0].mxu0
    %v288 = vpop.f32.mrb[0].mxu0
    %v289 = vpop.f32.mrb[0].mxu0
    %290 = vdwg.mxu0
    %v291 = vsel %vm195, %v286, 0.0
    %v292 = vrot.slane %v291, 4
    %v293 = vadd.f32 %v291, %v292
    %v294 = vrot.slane %v293, 2
    %v295 = vadd.f32 %v293, %v294
    %v296 = vrot.slane %v295, 1
    %v297 = vadd.f32 %v295, %v296
    %v298 = vmul.f32 %v297, 0.125
    %v299 = vmul.f32 %v286, %v286
    %v300 = vsel %vm195, %v299, 0.0
    %v301 = vrot.slane %v300, 4
    %v302 = vadd.f32 %v300, %v301
    %v303 = vrot.slane %v302, 2
    %v304 = vadd.f32 %v302, %v303
    %v305 = vrot.slane %v304, 1
    %v306 = vadd.f32 %v304, %v305
    %v307 = vmul.f32 %v306, 0.125
    %v308 = vmul.f32 %v298, %v298
    %v309 = vsub.f32 %v307, %v308
    %v310 = vmax.f32 %v309, 0.0
    %v311 = vadd.f32 %v310, 1e-05
    %v312 = vrsqrt.pop %v311
    %v313 = vmul.f32 %v34, %v312
    %v314 = vmul.f32 %v298, %v313
    %v316 = vrot.slane %v314, 7
    %v318 = vsub.f32 %v34, %v316
    %v319 = vlaneseq
    %v320 = vshrl.u32 %v319, 7
    %v321 = vsub.s32 4, %v320
    %v322 = vrot.slane %v313, %v321
    %v323 = vmul.f32 %v286, %v322
    %v324 = vlaneseq
    %v325 = vshrl.u32 %v324, 7
    %v326 = vsub.s32 5, %v325
    %v327 = vrot.slane %v318, %v326
    %v328 = vadd.f32 %v323, %v327
    %v329 = vmax.f32 %v328, 0.0
    %v330 = vpack.c.bf16 %v329, %v329
    %v331 = vlaneseq
    %v332 = vshrl.u32 %v331, 7
    %v333 = vsub.s32 6, %v332
    %v334 = vrot.slane %v34, %v333
    %v339 = vunpack.c.l.b16 %v30
    %v340 = vunpack.c.l.b16 %v31
    %v341 = vunpack.c.l.b16 %v32
    %v342 = vunpack.c.l.b16 %v33
    %v343 = vpack.c.b16 %v340, %v339
    %v344 = vpack.c.b16 %v342, %v341
    %v348 = vsel %vm195, %v330, 0
    %350 = vmatprep.subr.bf16.mxu0 0
    %351 = vmatpush1.bf16.msra.mxu0 %v343
    %352 = vmatprep.subr.bf16.mxu0 0
    %353 = vmatpush1.bf16.msra.mxu0 %v344
    %354 = vmatprep.subr.bf16.mxu0 0
    %355 = vmatpush1.bf16.msra.mxu0 0
    %356 = vmatprep.subr.bf16.mxu0 0
    %357 = vmatpush1.bf16.msra.mxu0 0
    %358 = vmatprep.subr.bf16.mxu0 0
    %359 = vmatpush1.bf16.msra.mxu0 0
    %360 = vmatprep.subr.bf16.mxu0 0
    %361 = vmatpush1.bf16.msra.mxu0 0
    %362 = vmatprep.subr.bf16.mxu0 0
    %363 = vmatpush1.bf16.msra.mxu0 0
    %364 = vmatprep.subr.bf16.mxu0 0
    %365 = vmatpush1.bf16.msra.mxu0 0
    %366 = vmatprep.subr.bf16.mxu0 0
    %367 = vmatpush1.bf16.msra.mxu0 0
    %368 = vmatprep.subr.bf16.mxu0 0
    %369 = vmatpush1.bf16.msra.mxu0 0
    %370 = vmatprep.subr.bf16.mxu0 0
    %371 = vmatpush1.bf16.msra.mxu0 0
    %372 = vmatprep.subr.bf16.mxu0 0
    %373 = vmatpush1.bf16.msra.mxu0 0
    %374 = vmatprep.subr.bf16.mxu0 0
    %375 = vmatpush1.bf16.msra.mxu0 0
    %376 = vmatprep.subr.bf16.mxu0 0
    %377 = vmatpush1.bf16.msra.mxu0 0
    %378 = vmatprep.subr.bf16.mxu0 0
    %379 = vmatpush1.bf16.msra.mxu0 0
    %380 = vmatprep.subr.bf16.mxu0 0
    %381 = vmatpush1.bf16.msra.mxu0 0
    %382 = vmatprep.mubr.bf16.mxu0 0
    %383 = vmatmul.mubr.bf16.gmra.mrb[0].mxu0 %v348
    %v384 = vpop.f32.mrb[0].mxu0
    %v385 = vadd.f32 %v334, %v384
    %v386 = vpop.f32.mrb[0].mxu0
    %v387 = vpop.f32.mrb[0].mxu0
    %v388 = vpop.f32.mrb[0].mxu0
    %389 = vdwg.mxu0
    %vm390 = vcmask 64512
    %v391 = vsel %vm390, %v385, -inf
    %v392 = vrot.slane %v391, 4
    %v393 = vmax.f32 %v391, %v392
    %v394 = vrot.slane %v393, 2
    %v395 = vmax.f32 %v393, %v394
    %v396 = vrot.slane %v395, 1
    %v397 = vmax.f32 %v395, %v396
    %v398 = vsub.f32 %v385, %v397
    %v399 = vmul.f32 %v398, 1.442695
    %v400 = vpow.pop %v399
    %401 = vst.msk [vmem:[#allocation2] sm:$0xff] %vm390, %v400
    %v402 = vld [vmem:[#allocation2] sm:$0xff]
    %v403 = vsel %vm390, %v402, 0.0
    %v404 = vrot.slane %v403, 4
    %v405 = vadd.f32 %v403, %v404
    %v406 = vrot.slane %v405, 2
    %v407 = vadd.f32 %v405, %v406
    %v408 = vrot.slane %v407, 1
    %v409 = vadd.f32 %v407, %v408
    %v410 = vrcp.pop %v409
    %v411 = vmul.f32 %v409, %v410
    %v412 = vsub.f32 2.0, %v411
    %v413 = vmul.f32 %v410, %v412
    %v414 = vmul.f32 %v402, %v413
    %415 = vst.msk [vmem:[#allocation2] sm:$0xff] %vm390, %v414
    // Predicated region
    $region14: #{three_layer_model_batnorm_masked.1} parent=1 // pred_check
      _
    $region15: #{three_layer_model_batnorm_masked.1} parent=1 // pred_check_branch
      %417 = sbr.rel (0) target = $region17
    $region16: #{three_layer_model_batnorm_masked.1} parent=1 // pred_region
      %s419 = ssub.s32 128, 128
      %420 = vsyncadd [#allocation3], %s419
      %s422 = sshll.u32 [#allocation2], 4
      %s423 = int_to_ptr.vmem [resolvable:$true] %s422
      %425 = dma.vmem_to_hbm [thread:$0]  %s423, 128, %s3, [#allocation3]
    $region17: #{three_layer_model_batnorm_masked.1} parent=1 // pred_fallthru
      _
    // Predicated region
    $region18: #{three_layer_model_batnorm_masked.1} parent=1 // pred_check
      _
    $region19: #{three_layer_model_batnorm_masked.1} parent=1 // pred_check_branch
      %427 = sbr.rel (0) target = $region21
    $region20: #{three_layer_model_batnorm_masked.1} parent=1 // pred_region
      %428 = dma.done [#allocation3], 128
    $region21: #{three_layer_model_batnorm_masked.1} parent=1 // pred_fallthru
      _
    %429 = vsyncpa [#allocation3], 1

</llo_original>
